<compile_context>
chip_gen: v7x
topology: tpu7x:2x2x1
jax: 0.10.0
libtpu: 0.0.40
codegen_flags: <defaults>
</compile_context>

<pallas_src>
import jax
import jax.numpy as jnp
from jax.experimental import pallas as pl
from jax.experimental.pallas import tpu as pltpu  # noqa: F401  (kept for TPU lowering)

# TODO(synk): `v0 = x1 - x2` is unused and has non-broadcastable shapes ((6,12) vs (12,6));
#             it is intentionally not computed.


def _addmm_kernel(x1_ref, x2_ref, inp_ref, out_ref):
    # Single fused expression: one MXU pass + one VPU mul/sub (free filler slots).
    out_ref[...] = (
        jnp.dot(x1_ref[...], x2_ref[...], preferred_element_type=jnp.float32)
        - 2.0 * inp_ref[...]
    ).astype(out_ref.dtype)


@jax.jit
def model_forward(x1, x2, inp):
    M, K = x1.shape
    K2, N = x2.shape
    assert K == K2 and inp.shape == (M, N)

    # Full-extent blocks (block_shape == whole array) satisfy the
    # "divisible-by-(8,128) OR equal to full dim" rule; Mosaic handles the
    # internal sub-tile padding, so no wrapper pads/slices are needed.
    return pl.pallas_call(
        _addmm_kernel,
        out_shape=jax.ShapeDtypeStruct((M, N), jnp.float32),
        in_specs=[
            pl.BlockSpec((M, K), lambda: (0, 0)),
            pl.BlockSpec((K, N), lambda: (0, 0)),
            pl.BlockSpec((M, N), lambda: (0, 0)),
        ],
        out_specs=pl.BlockSpec((M, N), lambda: (0, 0)),
        cost_estimate=pl.CostEstimate(
            flops=2 * M * N * K,
            bytes_accessed=(M * K + K * N + 2 * M * N) * 4,
            transcendentals=0,
        ),
    )(x1, x2, inp)


if __name__ == "__main__":
    key = jax.random.PRNGKey(0)
    k1, k2, k3 = jax.random.split(key, 3)
    # Shapes implied by the module: inp (6,6), x1 (6,12), x2 (12,6)
    inp = jax.random.normal(k1, (6, 6), dtype=jnp.float32)
    x1 = jax.random.normal(k2, (6, 12), dtype=jnp.float32)
    x2 = jax.random.normal(k3, (12, 6), dtype=jnp.float32)

    out = model_forward(x1, x2, inp)
    jax.block_until_ready(out)

    # Reference check in plain JAX (same semantics as the PyTorch module)
    ref = x1 @ x2 - 2.0 * inp
    assert out.shape == ref.shape, "shape mismatch vs reference"
    assert jnp.allclose(out, ref, atol=1e-5, rtol=1e-5), "mismatch vs reference"
    print("KERNEL_OK")
</pallas_src>

<mosaic_0001>
module attributes {stable_mosaic.version = 11 : i64} {
  func.func @_addmm_kernel(%arg0: memref<6x12xf32, #tpu.memory_space<vmem>>, %arg1: memref<12x6xf32, #tpu.memory_space<vmem>>, %arg2: memref<6x6xf32, #tpu.memory_space<vmem>>, %arg3: memref<6x6xf32, #tpu.memory_space<vmem>>) attributes {dimension_semantics = [], scalar_prefetch = 0 : i64, scratch_operands = 0 : i64, tpu.core_type = #tpu.core_type<tc>} {
    %c0 = arith.constant 0 : index
    %c0_0 = arith.constant 0 : index
    %0 = vector.load %arg0[%c0, %c0_0] : memref<6x12xf32, #tpu.memory_space<vmem>>, vector<6x12xf32>
    %c0_1 = arith.constant 0 : index
    %c0_2 = arith.constant 0 : index
    %1 = vector.load %arg1[%c0_1, %c0_2] : memref<12x6xf32, #tpu.memory_space<vmem>>, vector<12x6xf32>
    %cst = arith.constant dense<0.000000e+00> : vector<6x6xf32>
    %2 = tpu.matmul %0, %1, %cst {dimension_numbers = #tpu.dot_dimension_numbers<[1], [0], [0], [1], [0, 0, 1, 1], [], []>} : vector<6x12xf32>, vector<12x6xf32>, vector<6x6xf32> -> vector<6x6xf32>
    %c0_3 = arith.constant 0 : index
    %c0_4 = arith.constant 0 : index
    %3 = vector.load %arg2[%c0_3, %c0_4] : memref<6x6xf32, #tpu.memory_space<vmem>>, vector<6x6xf32>
    %cst_5 = arith.constant 2.000000e+00 : f32
    %4 = vector.broadcast %cst_5 : f32 to vector<6x6xf32>
    %5 = arith.mulf %4, %3 : vector<6x6xf32>
    %6 = arith.subf %2, %5 : vector<6x6xf32>
    %c0_6 = arith.constant 0 : index
    %c0_7 = arith.constant 0 : index
    %7 = vector.load %arg3[%c0_6, %c0_7] : memref<6x6xf32, #tpu.memory_space<vmem>>, vector<6x6xf32>
    tpu.vector_store %arg3[%c0_6, %c0_7], %6 {strides = array<i32>} : memref<6x6xf32, #tpu.memory_space<vmem>>, vector<6x6xf32>,
    return
  }
}

</mosaic_0001>

<llo_original>
// kernel: model_forward.1
$region0: #{model_forward.1}
  #allocation0 [shape = 'u32[]', space=smem, size = 0x4, offset = 0x4, fixed_abs, tag = 'smem constant byte address 0x4 - core index']
  #allocation1 [shape = 'u32[144,128]{1,0:T(1,128)}', space=vmem, size = 0x12000, scoped, tag = 'internal scratch']
  %s0 = inlined_call_operand.vmem [shape: f32[6,12], index: 0, kind: input, shape index: {}]
  %s1 = inlined_call_operand.vmem [shape: f32[12,6], index: 1, kind: input, shape index: {}]
  %s2 = inlined_call_operand.vmem [shape: f32[6,6], index: 2, kind: input, shape index: {}]
  %s3 = inlined_call_operand.hbm [shape: f32[6,6], index: 3, kind: output, shape index: {}]
  %s4 = sld [smem:[#allocation0]]
  $region22: #{model_forward.1} parent=0
    _
  %s6 = ssub.s32 1, %s4
  %s7 = scalar_select 0, %s6, %s4
  $region1: #{model_forward.1} parent=0
    #allocation2 [shape = 'u8[4096]{0}', space=vmem, size = 0x1000, scoped, tag = 'output window, operand 0, single buffered']
    #allocation3 [shape = 's32[1]{0}', space=sflag, size = 0x4, scoped, tag = 'scoped memory for model_forward.1']
    %8 = vsyncpa [#allocation3], 0
    // Predicated region
    $region2: #{model_forward.1} parent=1 // pred_check
      _
    $region3: #{model_forward.1} parent=1 // pred_check_branch
      %10 = sbr.rel (0) target = $region5
    $region4: #{model_forward.1} parent=1 // pred_region
      _
    $region5: #{model_forward.1} parent=1 // pred_fallthru
      _
    // Predicated region
    $region6: #{model_forward.1} parent=1 // pred_check
      _
    $region7: #{model_forward.1} parent=1 // pred_check_branch
      %12 = sbr.rel (0) target = $region9
    $region8: #{model_forward.1} parent=1 // pred_region
      _
    $region9: #{model_forward.1} parent=1 // pred_fallthru
      _
    // Predicated region
    $region10: #{model_forward.1} parent=1 // pred_check
      _
    $region11: #{model_forward.1} parent=1 // pred_check_branch
      %14 = sbr.rel (0) target = $region13
    $region12: #{model_forward.1} parent=1 // pred_region
      _
    $region13: #{model_forward.1} parent=1 // pred_fallthru
      _
    %v15 = vld [vmem:[%s0] sm:$0x3f]
    %v16 = vld [vmem:[%s1] sm:$0xff]
    %v17 = vld [vmem:[%s1 + $0x8] sm:$0xf]
    %vm18 = vcmask 97280
    %v20 = vsel %vm18, %v15, 0
    %vm22 = vcmask 1043456
    %v24 = vsel %vm22, %v17, 0
    %26 = vmatprep.subr.mxu0 0.0
    %27 = vmatpush1.msra.mxu0 %v16
    %28 = vmatprep.subr.mxu0 0.0
    %29 = vmatpush1.msra.mxu0 %v24
    %30 = vmatprep.subr.mxu0 0.0
    %31 = vmatpush1.msra.mxu0 0.0
    %32 = vmatprep.subr.mxu0 0.0
    %33 = vmatpush1.msra.mxu0 0.0
    %34 = vmatprep.subr.mxu0 0.0
    %35 = vmatpush1.msra.mxu0 0.0
    %36 = vmatprep.subr.mxu0 0.0
    %37 = vmatpush1.msra.mxu0 0.0
    %38 = vmatprep.subr.mxu0 0.0
    %39 = vmatpush1.msra.mxu0 0.0
    %40 = vmatprep.subr.mxu0 0.0
    %41 = vmatpush1.msra.mxu0 0.0
    %42 = vmatprep.subr.mxu0 0.0
    %43 = vmatpush1.msra.mxu0 0.0
    %44 = vmatprep.subr.mxu0 0.0
    %45 = vmatpush1.msra.mxu0 0.0
    %46 = vmatprep.subr.mxu0 0.0
    %47 = vmatpush1.msra.mxu0 0.0
    %48 = vmatprep.subr.mxu0 0.0
    %49 = vmatpush1.msra.mxu0 0.0
    %50 = vmatprep.subr.mxu0 0.0
    %51 = vmatpush1.msra.mxu0 0.0
    %52 = vmatprep.subr.mxu0 0.0
    %53 = vmatpush1.msra.mxu0 0.0
    %54 = vmatprep.subr.mxu0 0.0
    %55 = vmatpush1.msra.mxu0 0.0
    %56 = vmatprep.subr.mxu0 0.0
    %57 = vmatpush1.msra.mxu0 0.0
    %58 = vmatprep.subr.mxu0 0.0
    %59 = vmatpush1.msra.mxu0 0.0
    %60 = vmatprep.subr.mxu0 0.0
    %61 = vmatpush1.msra.mxu0 0.0
    %62 = vmatprep.subr.mxu0 0.0
    %63 = vmatpush1.msra.mxu0 0.0
    %64 = vmatprep.subr.mxu0 0.0
    %65 = vmatpush1.msra.mxu0 0.0
    %66 = vmatprep.subr.mxu0 0.0
    %67 = vmatpush1.msra.mxu0 0.0
    %68 = vmatprep.subr.mxu0 0.0
    %69 = vmatpush1.msra.mxu0 0.0
    %70 = vmatprep.subr.mxu0 0.0
    %71 = vmatpush1.msra.mxu0 0.0
    %72 = vmatprep.subr.mxu0 0.0
    %73 = vmatpush1.msra.mxu0 0.0
    %74 = vmatprep.subr.mxu0 0.0
    %75 = vmatpush1.msra.mxu0 0.0
    %76 = vmatprep.subr.mxu0 0.0
    %77 = vmatpush1.msra.mxu0 0.0
    %78 = vmatprep.subr.mxu0 0.0
    %79 = vmatpush1.msra.mxu0 0.0
    %80 = vmatprep.subr.mxu0 0.0
    %81 = vmatpush1.msra.mxu0 0.0
    %82 = vmatprep.subr.mxu0 0.0
    %83 = vmatpush1.msra.mxu0 0.0
    %84 = vmatprep.subr.mxu0 0.0
    %85 = vmatpush1.msra.mxu0 0.0
    %86 = vmatprep.subr.mxu0 0.0
    %87 = vmatpush1.msra.mxu0 0.0
    %88 = vmatprep.subr.mxu0 0.0
    %89 = vmatpush1.msra.mxu0 0.0
    %90 = vmatprep.mubr.f32.mxu0 0.0
    %91 = vmatmul.mubr.f32.gmra.mrb[0].mxu0 %v20
    %v92 = vpop.f32.mrb[0].mxu0
    %v93 = vadd.f32 0.0, %v92
    %v94 = vpop.f32.mrb[0].mxu0
    %95 = vdwg.mxu0
    %v96 = vld [vmem:[%s2] sm:$0x3f]
    %v97 = vmul.f32 %v96, 2.0
    %v98 = vsub.f32 %v93, %v97
    %vm99 = vcmask 46080
    %100 = vst.msk [vmem:[#allocation2] sm:$0x3f] %vm99, %v98
    // Predicated region
    $region14: #{model_forward.1} parent=1 // pred_check
      _
    $region15: #{model_forward.1} parent=1 // pred_check_branch
      %102 = sbr.rel (0) target = $region17
    $region16: #{model_forward.1} parent=1 // pred_region
      %s104 = ssub.s32 128, 128
      %105 = vsyncadd [#allocation3], %s104
      %s107 = sshll.u32 [#allocation2], 4
      %s108 = int_to_ptr.vmem [resolvable:$true] %s107
      %110 = dma.vmem_to_hbm [thread:$0]  %s108, 128, %s3, [#allocation3]
    $region17: #{model_forward.1} parent=1 // pred_fallthru
      _
    // Predicated region
    $region18: #{model_forward.1} parent=1 // pred_check
      _
    $region19: #{model_forward.1} parent=1 // pred_check_branch
      %112 = sbr.rel (0) target = $region21
    $region20: #{model_forward.1} parent=1 // pred_region
      %113 = dma.done [#allocation3], 128
    $region21: #{model_forward.1} parent=1 // pred_fallthru
      _
    %114 = vsyncpa [#allocation3], 1

</llo_original>
